<compile_context>
chip_gen: v7x
topology: tpu7x:2x2x1
jax: 0.10.0
libtpu: 0.0.40
codegen_flags: <defaults>
</compile_context>

<pallas_src>
import jax
import jax.numpy as jnp
from jax.experimental import pallas as pl
from jax.experimental.pallas import tpu as pltpu

_MiB = 1024 * 1024


# --------------------------------------------------------------------------
# Small helpers
# --------------------------------------------------------------------------
def _cdiv(a: int, b: int) -> int:
    return (a + b - 1) // b


def _round_up(n: int, m: int) -> int:
    return ((n + m - 1) // m) * m


def _sublane(dtype) -> int:
    # Rows per packed sublane group: 8 (f32), 16 (bf16), 32 (int8/fp8).
    return max(8, 32 // jnp.dtype(dtype).itemsize)


def _pad2d(a, rows: int, cols: int):
    pr, pc = rows - a.shape[0], cols - a.shape[1]
    if pr == 0 and pc == 0:
        return a
    return jnp.pad(a, ((0, pr), (0, pc)))


def _vmem_budget_bytes() -> int:
    """~80% of per-core VMEM (v5e/v6e 128 MiB, v7x 64 MiB per TC)."""
    try:
        cap = int(pltpu.get_tpu_info().vmem_capacity_bytes)
    except Exception:
        cap = 64 * _MiB  # conservative fallback (v7x per-TC VMEM)
    return int(cap * 0.8)


def _resident_spec(block_shape, index_map, single_buffer: bool):
    """BlockSpec for a constant-index (VMEM-resident) operand.

    Buffered(1) halves the resident-weight footprint (the constant index_map
    means it is never re-DMA'd, so double buffering is pure waste).
    """
    if single_buffer:
        return pl.BlockSpec(block_shape, index_map, pipeline_mode=pl.Buffered(1))
    return pl.BlockSpec(block_shape, index_map)


# --------------------------------------------------------------------------
# Kernels
# --------------------------------------------------------------------------
def _mlp_kernel(x_ref, w1_ref, b1_ref, w2_ref, b2_ref, o_ref):
    """Fully fused MLP tile: whole H resident in VMEM."""
    x = x_ref[...].astype(w1_ref.dtype)
    h = jnp.dot(x, w1_ref[...], preferred_element_type=jnp.float32)
    h = jnp.maximum(h + b1_ref[...], 0.0)            # f32 bias + ReLU on VPU
    y = jnp.dot(h.astype(w2_ref.dtype), w2_ref[...],
                preferred_element_type=jnp.float32)
    o_ref[...] = (y + b2_ref[...]).astype(o_ref.dtype)


def _mlp_kernel_htiled(x_ref, w1_ref, b1_ref, w2_ref, b2_ref, o_ref, acc_ref):
    """H-chunked MLP: relu(x @ W1[:, chunk] + b1[chunk]) @ W2[chunk, :] summed
    into an f32 accumulator; bias2 + store on the last chunk."""
    k = pl.program_id(1)

    @pl.when(k == 0)
    def _():
        acc_ref[...] = jnp.zeros_like(acc_ref)

    x = x_ref[...].astype(w1_ref.dtype)
    h = jnp.dot(x, w1_ref[...], preferred_element_type=jnp.float32)
    h = jnp.maximum(h + b1_ref[...], 0.0)
    acc_ref[...] += jnp.dot(h.astype(w2_ref.dtype), w2_ref[...],
                            preferred_element_type=jnp.float32)

    @pl.when(k == pl.num_programs(1) - 1)
    def _():
        o_ref[...] = (acc_ref[...] + b2_ref[...]).astype(o_ref.dtype)


# --------------------------------------------------------------------------
# Parameter preparation (pad once, reuse every forward call)
# --------------------------------------------------------------------------
def prepare_params(w1, b1, w2, b2, *, compute_dtype=None):
    """Pad weights/biases to lane-dense shapes once.

    w1: (X, H), b1: (H,), w2: (H, Y), b2: (Y,).  compute_dtype (e.g.
    jnp.bfloat16) optionally casts the GEMM weights (f32 accumulation kept).
    """
    X, H = w1.shape
    H2, Y = w2.shape
    assert H2 == H and b1.shape == (H,) and b2.shape == (Y,)
    Hp = _round_up(H, 128)
    Yp = _round_up(Y, 128)
    wdt = jnp.dtype(compute_dtype) if compute_dtype is not None else w1.dtype
    return dict(
        w1=_pad2d(w1, X, Hp).astype(wdt),
        b1=_pad2d(b1.reshape(1, H), 1, Hp).astype(jnp.float32),
        w2=_pad2d(w2, Hp, Yp).astype(wdt),
        b2=_pad2d(b2.reshape(1, Y), 1, Yp).astype(jnp.float32),
        dims=(X, H, Y),
    )


# --------------------------------------------------------------------------
# Forward
# --------------------------------------------------------------------------
def my_mlp_forward(x, params, *, batch_tile=512, h_tile=512,
                   force_path=None, vmem_limit_bytes=None):
    """y = relu(x @ W1 + b1) @ W2 + b2.

    x: (B, X); params: dict from prepare_params(); returns (B, Y).
    force_path: None (auto) | "gridless" | "tiled" | "htiled".
    """
    assert force_path in (None, "gridless", "tiled", "htiled")
    X, H, Y = params["dims"]
    w1_p, b1_p, w2_p, b2_p = params["w1"], params["b1"], params["w2"], params["b2"]
    Hp, Yp = w1_p.shape[1], w2_p.shape[1]
    B = x.shape[0]
    assert x.shape == (B, X)

    out_dtype = x.dtype
    xb = jnp.dtype(x.dtype).itemsize
    wb = jnp.dtype(w1_p.dtype).itemsize
    ob = jnp.dtype(out_dtype).itemsize
    sub = _sublane(out_dtype)
    budget = _vmem_budget_bytes()

    weight_bytes = (w1_p.size + w2_p.size) * wb + (b1_p.size + b2_p.size) * 4

    # ---- byte-based path selection --------------------------------------
    Bp_small = _round_up(B, sub)
    gridless_bytes = (weight_bytes + Bp_small * X * xb
                      + Bp_small * Hp * 4 + Bp_small * Yp * (4 + ob))
    path = force_path
    if path is None:
        if gridless_bytes <= budget // 2:
            path = "gridless"
        elif weight_bytes <= int(budget * 0.6):
            path = "tiled"
        else:
            path = "htiled"

    cost = pl.CostEstimate(
        flops=2 * B * (X * H + H * Y),
        transcendentals=0,
        bytes_accessed=B * X * xb + weight_bytes + B * Y * ob,
    )

    # ---- gridless: whole problem in VMEM, no pipeline --------------------
    if path == "gridless":
        x_p = _pad2d(x, Bp_small, X)  # sublane-align rows only (tiny pad)
        limit = (vmem_limit_bytes if vmem_limit_bytes is not None
                 else min(budget, max(2 * gridless_bytes, 32 * _MiB)))
        out_p = pl.pallas_call(
            _mlp_kernel,
            out_shape=jax.ShapeDtypeStruct((Bp_small, Yp), out_dtype),
            cost_estimate=cost,
            compiler_params=pltpu.CompilerParams(vmem_limit_bytes=limit),
        )(x_p, w1_p, b1_p, w2_p, b2_p)
        return out_p[:B, :Y]

    # ---- batch tile selection (shared by tiled / htiled) ----------------
    tm = min(_round_up(batch_tile, sub), _round_up(B, sub))
    # v7x megacore: make sure the "parallel" batch axis has >= 2 steps.
    if _cdiv(B, tm) < 2 and B > 2 * sub:
        tm = _round_up(_cdiv(B, 2), sub)

    if path == "tiled":
        # Stream x/y; W1/b1/W2/b2 VMEM-resident (single-buffered).
        def step_bytes(t):
            return (weight_bytes + 2 * t * X * xb + 2 * t * Yp * ob
                    + t * Hp * 4 + t * Yp * 4)

        while tm > sub and step_bytes(tm) > budget:
            tm = _round_up(tm // 2, sub)
        nb = _cdiv(B, tm)
        limit = (vmem_limit_bytes if vmem_limit_bytes is not None
                 else min(budget, max(int(1.5 * step_bytes(tm)), 32 * _MiB)))

        def run(single_buffer):
            in_specs = [
                pl.BlockSpec((tm, X), lambda i: (i, 0)),              # x streams
                _resident_spec((X, Hp), lambda i: (0, 0), single_buffer),
                _resident_spec((1, Hp), lambda i: (0, 0), single_buffer),
                _resident_spec((Hp, Yp), lambda i: (0, 0), single_buffer),
                _resident_spec((1, Yp), lambda i: (0, 0), single_buffer),
            ]
            return pl.pallas_call(
                _mlp_kernel,
                out_shape=jax.ShapeDtypeStruct((B, Yp), out_dtype),
                grid=(nb,),
                in_specs=in_specs,
                out_specs=pl.BlockSpec((tm, Yp), lambda i: (i, 0)),
                cost_estimate=cost,
                compiler_params=pltpu.CompilerParams(
                    dimension_semantics=("parallel",),
                    vmem_limit_bytes=limit),
            )(x, w1_p, b1_p, w2_p, b2_p)

        try:
            out_p = run(True)       # single-buffered resident weights
        except Exception:           # pl.Buffered(1) unsupported on this jax
            out_p = run(False)
        return out_p[:, :Y]

    # ---- htiled: H-chunked accumulator path (weights too big for VMEM) ---
    # th: largest multiple of 128 that divides Hp and is <= h_tile.
    th = max(128, min((_round_up(h_tile, 128) // 128) * 128, Hp))
    while Hp % th != 0:
        th -= 128

    def step_bytes_h(t, c):
        return (2 * X * c * wb + 2 * c * 4 + 2 * c * Yp * wb + Yp * 4
                + 2 * t * X * xb + 2 * t * Yp * ob + t * Yp * 4 + t * c * 4)

    while tm > sub and step_bytes_h(tm, th) > budget:
        tm = _round_up(tm // 2, sub)
    while th > 128 and step_bytes_h(tm, th) > budget:
        th -= 128
        while Hp % th != 0:
            th -= 128
    nb, nk = _cdiv(B, tm), Hp // th
    limit = (vmem_limit_bytes if vmem_limit_bytes is not None
             else min(budget, max(int(1.5 * step_bytes_h(tm, th)), 32 * _MiB)))

    def run_h(single_buffer):
        in_specs = [
            pl.BlockSpec((tm, X), lambda i, k: (i, 0)),      # x: per batch tile
            pl.BlockSpec((X, th), lambda i, k: (0, k)),      # W1 column chunk
            pl.BlockSpec((1, th), lambda i, k: (0, k)),      # b1 chunk
            pl.BlockSpec((th, Yp), lambda i, k: (k, 0)),     # W2 row chunk
            _resident_spec((1, Yp), lambda i, k: (0, 0), single_buffer),  # b2
        ]
        return pl.pallas_call(
            _mlp_kernel_htiled,
            out_shape=jax.ShapeDtypeStruct((B, Yp), out_dtype),
            grid=(nb, nk),                                   # reduction axis last
            in_specs=in_specs,
            out_specs=pl.BlockSpec((tm, Yp), lambda i, k: (i, 0)),
            scratch_shapes=[pltpu.VMEM((tm, Yp), jnp.float32)],
            cost_estimate=cost,
            compiler_params=pltpu.CompilerParams(
                dimension_semantics=("parallel", "arbitrary"),
                vmem_limit_bytes=limit),
        )(x, w1_p, b1_p, w2_p, b2_p)

    try:
        out_p = run_h(True)
    except Exception:
        out_p = run_h(False)
    return out_p[:, :Y]


# --------------------------------------------------------------------------
# Init + reference
# --------------------------------------------------------------------------
def init_params(key, X_dim, h_dim, Y_dim, dtype=jnp.float32):
    """Deterministic PyTorch-style (uniform +-1/sqrt(fan_in)) init."""
    k1, k2, k3, k4 = jax.random.split(key, 4)
    lim1 = 1.0 / (X_dim ** 0.5)
    lim2 = 1.0 / (h_dim ** 0.5)
    # Stored already transposed to (in, out) for x @ W.
    w1 = jax.random.uniform(k1, (X_dim, h_dim), dtype, -lim1, lim1)
    b1 = jax.random.uniform(k2, (h_dim,), dtype, -lim1, lim1)
    w2 = jax.random.uniform(k3, (h_dim, Y_dim), dtype, -lim2, lim2)
    b2 = jax.random.uniform(k4, (Y_dim,), dtype, -lim2, lim2)
    return w1, b1, w2, b2


def _ref(x, w1, b1, w2, b2):
    return jnp.maximum(x @ w1 + b1, 0.0) @ w2 + b2


if __name__ == "__main__":
    key = jax.random.PRNGKey(0)
    kx, kp, kb, kh = jax.random.split(key, 4)

    # MyMLP(configs, X_dim, Y_dim, h_dim): Linear(X,h) -> ReLU -> Linear(h,Y)
    B, X_dim, h_dim, Y_dim = 8, 16, 32, 8
    x = jax.random.normal(kx, (B, X_dim), dtype=jnp.float32)
    w1, b1, w2, b2 = init_params(kp, X_dim, h_dim, Y_dim)
    params = prepare_params(w1, b1, w2, b2)   # pad once, reuse every call

    # 1) auto path (whole problem fits in VMEM -> gridless, no pipeline).
    out = jax.block_until_ready(my_mlp_forward(x, params))
    ref = _ref(x, w1, b1, w2, b2)
    assert out.shape == (B, Y_dim)
    assert jnp.allclose(out, ref, atol=1e-4, rtol=1e-4)

    # 2) batch-tiled path: weights VMEM-resident (single-buffered), batch axis
    #    "parallel" with 2 steps, non-multiple B exercises boundary masking.
    B_big = 1000
    x_big = jax.random.normal(kb, (B_big, X_dim), dtype=jnp.float32)
    out_big = jax.block_until_ready(
        my_mlp_forward(x_big, params, batch_tile=512, force_path="tiled"))
    ref_big = _ref(x_big, w1, b1, w2, b2)
    assert out_big.shape == (B_big, Y_dim)
    assert jnp.allclose(out_big, ref_big, atol=1e-4, rtol=1e-4)

    # 3) H-tiled accumulator path (the v7x small-VMEM strategy), small shapes:
    #    3 H-chunks x 3 batch tiles, partial last batch tile.
    X2, H2, Y2, B2 = 24, 384, 40, 272
    k1, k2 = jax.random.split(kh)
    x2 = jax.random.normal(k1, (B2, X2), dtype=jnp.float32)
    w1b, b1b, w2b, b2b = init_params(k2, X2, H2, Y2)
    params2 = prepare_params(w1b, b1b, w2b, b2b)
    out2 = jax.block_until_ready(
        my_mlp_forward(x2, params2, batch_tile=128, h_tile=128,
                       force_path="htiled"))
    ref2 = _ref(x2, w1b, b1b, w2b, b2b)
    assert out2.shape == (B2, Y2)
    assert jnp.allclose(out2, ref2, atol=1e-3, rtol=1e-3)

    # TODO(synk): for multi-chip serving, add a remote-DMA all-gather of the
    # batch shards; single-chip forward needs none.
    print("KERNEL_OK")
</pallas_src>

<mosaic_0001>
module attributes {stable_mosaic.version = 11 : i64} {
  func.func @_mlp_kernel(%arg0: memref<8x16xf32, #tpu.memory_space<vmem>>, %arg1: memref<16x128xf32, #tpu.memory_space<vmem>>, %arg2: memref<1x128xf32, #tpu.memory_space<vmem>>, %arg3: memref<128x128xf32, #tpu.memory_space<vmem>>, %arg4: memref<1x128xf32, #tpu.memory_space<vmem>>, %arg5: memref<8x128xf32, #tpu.memory_space<vmem>>) attributes {dimension_semantics = [], scalar_prefetch = 0 : i64, scratch_operands = 0 : i64, tpu.core_type = #tpu.core_type<tc>} {
    %c0 = arith.constant 0 : index
    %c0_0 = arith.constant 0 : index
    %0 = vector.load %arg0[%c0, %c0_0] : memref<8x16xf32, #tpu.memory_space<vmem>>, vector<8x16xf32>
    %c0_1 = arith.constant 0 : index
    %c0_2 = arith.constant 0 : index
    %1 = vector.load %arg1[%c0_1, %c0_2] : memref<16x128xf32, #tpu.memory_space<vmem>>, vector<16x128xf32>
    %cst = arith.constant dense<0.000000e+00> : vector<8x128xf32>
    %2 = tpu.matmul %0, %1, %cst {dimension_numbers = #tpu.dot_dimension_numbers<[1], [0], [0], [1], [0, 0, 1, 1], [], []>} : vector<8x16xf32>, vector<16x128xf32>, vector<8x128xf32> -> vector<8x128xf32>
    %c0_3 = arith.constant 0 : index
    %c0_4 = arith.constant 0 : index
    %3 = vector.load %arg2[%c0_3, %c0_4] : memref<1x128xf32, #tpu.memory_space<vmem>>, vector<1x128xf32>
    %4 = vector.broadcast %3 : vector<1x128xf32> to vector<8x128xf32>
    %5 = arith.addf %2, %4 : vector<8x128xf32>
    %cst_5 = arith.constant 0.000000e+00 : f32
    %6 = vector.broadcast %cst_5 : f32 to vector<8x128xf32>
    %7 = arith.maximumf %5, %6 : vector<8x128xf32>
    %c0_6 = arith.constant 0 : index
    %c0_7 = arith.constant 0 : index
    %8 = vector.load %arg3[%c0_6, %c0_7] : memref<128x128xf32, #tpu.memory_space<vmem>>, vector<128x128xf32>
    %cst_8 = arith.constant dense<0.000000e+00> : vector<8x128xf32>
    %9 = tpu.matmul %7, %8, %cst_8 {dimension_numbers = #tpu.dot_dimension_numbers<[1], [0], [0], [1], [0, 0, 1, 1], [], []>} : vector<8x128xf32>, vector<128x128xf32>, vector<8x128xf32> -> vector<8x128xf32>
    %c0_9 = arith.constant 0 : index
    %c0_10 = arith.constant 0 : index
    %10 = vector.load %arg4[%c0_9, %c0_10] : memref<1x128xf32, #tpu.memory_space<vmem>>, vector<1x128xf32>
    %11 = vector.broadcast %10 : vector<1x128xf32> to vector<8x128xf32>
    %12 = arith.addf %9, %11 : vector<8x128xf32>
    %c0_11 = arith.constant 0 : index
    %c0_12 = arith.constant 0 : index
    %13 = vector.load %arg5[%c0_11, %c0_12] : memref<8x128xf32, #tpu.memory_space<vmem>>, vector<8x128xf32>
    tpu.vector_store %arg5[%c0_11, %c0_12], %12 {strides = array<i32>} : memref<8x128xf32, #tpu.memory_space<vmem>>, vector<8x128xf32>,
    return
  }
}

</mosaic_0001>

<llo_original>
// kernel: tpu_custom_call.1
$region0: #{tpu_custom_call.1}
  #allocation0 [shape = 'u32[]', space=smem, size = 0x4, offset = 0x4, fixed_abs, tag = 'smem constant byte address 0x4 - core index']
  #allocation1 [shape = 'u32[144,128]{1,0:T(1,128)}', space=vmem, size = 0x12000, scoped, tag = 'internal scratch']
  %s0 = inlined_call_operand.hbm [shape: f32[8,16], index: 0, kind: input, shape index: {}]
  %s1 = inlined_call_operand.hbm [shape: f32[16,128], index: 1, kind: input, shape index: {}]
  %s2 = inlined_call_operand.vmem [shape: f32[1,128], index: 2, kind: input, shape index: {}]
  %s3 = inlined_call_operand.hbm [shape: f32[128,128], index: 3, kind: input, shape index: {}]
  %s4 = inlined_call_operand.vmem [shape: f32[1,128], index: 4, kind: input, shape index: {}]
  %s5 = inlined_call_operand.hbm [shape: f32[8,128], index: 5, kind: output, shape index: {}]
  %s6 = sld [smem:[#allocation0]]
  $region42: #{tpu_custom_call.1} parent=0
    _
  %s8 = ssub.s32 1, %s6
  %s9 = scalar_select 0, %s8, %s6
  $region1: #{tpu_custom_call.1} parent=0
    #allocation2 [shape = 'u8[4096]{0}', space=vmem, size = 0x1000, scoped, tag = 'input window, operand 0, single buffered']
    #allocation3 [shape = 's32[1]{0}', space=sflag, size = 0x4, scoped, tag = 'scoped memory for tpu_custom_call.1']
    #allocation4 [shape = 's32[1]{0}', space=sflag, size = 0x4, scoped, tag = 'scoped memory for tpu_custom_call.1']
    #allocation5 [shape = 'u8[8192]{0}', space=vmem, size = 0x2000, scoped, tag = 'input window, operand 1, single buffered']
    #allocation6 [shape = 's32[1]{0}', space=sflag, size = 0x4, scoped, tag = 'scoped memory for tpu_custom_call.1']
    #allocation7 [shape = 'u8[65536]{0}', space=vmem, size = 0x10000, scoped, tag = 'input window, operand 3, single buffered']
    #allocation8 [shape = 'u8[4096]{0}', space=vmem, size = 0x1000, scoped, tag = 'output window, operand 0, single buffered']
    %10 = vsyncpa [#allocation3], 0
    %11 = vsyncpa [#allocation6], 0
    %12 = vsyncpa [#allocation4], 0
    // Predicated region
    $region2: #{tpu_custom_call.1} parent=1 // pred_check
      _
    $region3: #{tpu_custom_call.1} parent=1 // pred_check_branch
      %14 = sbr.rel (0) target = $region5
    $region4: #{tpu_custom_call.1} parent=1 // pred_region
      %s16 = ssub.s32 128, 128
      %17 = vsyncadd [#allocation3], %s16
      %s19 = sshll.u32 [#allocation2], 4
      %s20 = int_to_ptr.vmem [resolvable:$true] %s19
      %22 = dma.hbm_to_vmem [thread:$0]  %s0, 128, %s20, [#allocation3]
    $region5: #{tpu_custom_call.1} parent=1 // pred_fallthru
      _
    // Predicated region
    $region6: #{tpu_custom_call.1} parent=1 // pred_check
      _
    $region7: #{tpu_custom_call.1} parent=1 // pred_check_branch
      %24 = sbr.rel (0) target = $region9
    $region8: #{tpu_custom_call.1} parent=1 // pred_region
      %s26 = ssub.s32 256, 256
      %27 = vsyncadd [#allocation6], %s26
      %s28 = sshll.u32 [#allocation5], 4
      %s29 = int_to_ptr.vmem [resolvable:$true] %s28
      %34 = dma.hbm_to_vmem [thread:$0]  %s1, 256, %s29, [#allocation6], 128, 128, 8
    $region9: #{tpu_custom_call.1} parent=1 // pred_fallthru
      _
    // Predicated region
    $region10: #{tpu_custom_call.1} parent=1 // pred_check
      _
    $region11: #{tpu_custom_call.1} parent=1 // pred_check_branch
      %36 = sbr.rel (0) target = $region13
    $region12: #{tpu_custom_call.1} parent=1 // pred_region
      _
    $region13: #{tpu_custom_call.1} parent=1 // pred_fallthru
      _
    // Predicated region
    $region14: #{tpu_custom_call.1} parent=1 // pred_check
      _
    $region15: #{tpu_custom_call.1} parent=1 // pred_check_branch
      %38 = sbr.rel (0) target = $region17
    $region16: #{tpu_custom_call.1} parent=1 // pred_region
      %s40 = ssub.s32 2048, 2048
      %41 = vsyncadd [#allocation6], %s40
      %s42 = sshll.u32 [#allocation7], 4
      %s43 = int_to_ptr.vmem [resolvable:$true] %s42
      %48 = dma.hbm_to_vmem [thread:$0]  %s3, 2048, %s43, [#allocation6], 128, 128, 8
    $region17: #{tpu_custom_call.1} parent=1 // pred_fallthru
      _
    // Predicated region
    $region18: #{tpu_custom_call.1} parent=1 // pred_check
      _
    $region19: #{tpu_custom_call.1} parent=1 // pred_check_branch
      %50 = sbr.rel (0) target = $region21
    $region20: #{tpu_custom_call.1} parent=1 // pred_region
      _
    $region21: #{tpu_custom_call.1} parent=1 // pred_fallthru
      _
    // Predicated region
    $region22: #{tpu_custom_call.1} parent=1 // pred_check
      _
    $region23: #{tpu_custom_call.1} parent=1 // pred_check_branch
      %52 = sbr.rel (0) target = $region25
    $region24: #{tpu_custom_call.1} parent=1 // pred_region
      %53 = dma.done [#allocation3], 128
    $region25: #{tpu_custom_call.1} parent=1 // pred_fallthru
      _
    // Predicated region
    $region26: #{tpu_custom_call.1} parent=1 // pred_check
      _
    $region27: #{tpu_custom_call.1} parent=1 // pred_check_branch
      %55 = sbr.rel (0) target = $region29
    $region28: #{tpu_custom_call.1} parent=1 // pred_region
      %56 = dma.done [#allocation6], 256
    $region29: #{tpu_custom_call.1} parent=1 // pred_fallthru
      _
    // Predicated region
    $region30: #{tpu_custom_call.1} parent=1 // pred_check
      _
    $region31: #{tpu_custom_call.1} parent=1 // pred_check_branch
      %58 = sbr.rel (0) target = $region33
    $region32: #{tpu_custom_call.1} parent=1 // pred_region
      %59 = dma.done [#allocation6], 2048
    $region33: #{tpu_custom_call.1} parent=1 // pred_fallthru
      _
    %v60 = vld [vmem:[#allocation2] sm:$0xff]
    %v61 = vld [vmem:[#allocation5] sm:$0xff]
    %v62 = vld [vmem:[#allocation5 + $0x8] sm:$0xff]
    %v63 = vld [vmem:[%s2] sm:$0x1]
    %v65 = vlaneseq
    %v66 = vshrl.u32 %v65, 7
    %v67 = vsub.s32 0, %v66
    %v68 = vrot.slane %v63, %v67
    %vm70 = vcmask 130048
    %v72 = vsel %vm70, %v60, 0
    %74 = vmatprep.subr.mxu0 0.0
    %75 = vmatpush1.msra.mxu0 %v61
    %76 = vmatprep.subr.mxu0 0.0
    %77 = vmatpush1.msra.mxu0 %v62
    %78 = vmatprep.subr.mxu0 0.0
    %79 = vmatpush1.msra.mxu0 0.0
    %80 = vmatprep.subr.mxu0 0.0
    %81 = vmatpush1.msra.mxu0 0.0
    %82 = vmatprep.subr.mxu0 0.0
    %83 = vmatpush1.msra.mxu0 0.0
    %84 = vmatprep.subr.mxu0 0.0
    %85 = vmatpush1.msra.mxu0 0.0
    %86 = vmatprep.subr.mxu0 0.0
    %87 = vmatpush1.msra.mxu0 0.0
    %88 = vmatprep.subr.mxu0 0.0
    %89 = vmatpush1.msra.mxu0 0.0
    %90 = vmatprep.subr.mxu0 0.0
    %91 = vmatpush1.msra.mxu0 0.0
    %92 = vmatprep.subr.mxu0 0.0
    %93 = vmatpush1.msra.mxu0 0.0
    %94 = vmatprep.subr.mxu0 0.0
    %95 = vmatpush1.msra.mxu0 0.0
    %96 = vmatprep.subr.mxu0 0.0
    %97 = vmatpush1.msra.mxu0 0.0
    %98 = vmatprep.subr.mxu0 0.0
    %99 = vmatpush1.msra.mxu0 0.0
    %100 = vmatprep.subr.mxu0 0.0
    %101 = vmatpush1.msra.mxu0 0.0
    %102 = vmatprep.subr.mxu0 0.0
    %103 = vmatpush1.msra.mxu0 0.0
    %104 = vmatprep.subr.mxu0 0.0
    %105 = vmatpush1.msra.mxu0 0.0
    %106 = vmatprep.subr.mxu0 0.0
    %107 = vmatpush1.msra.mxu0 0.0
    %108 = vmatprep.subr.mxu0 0.0
    %109 = vmatpush1.msra.mxu0 0.0
    %110 = vmatprep.subr.mxu0 0.0
    %111 = vmatpush1.msra.mxu0 0.0
    %112 = vmatprep.subr.mxu0 0.0
    %113 = vmatpush1.msra.mxu0 0.0
    %114 = vmatprep.subr.mxu0 0.0
    %115 = vmatpush1.msra.mxu0 0.0
    %116 = vmatprep.subr.mxu0 0.0
    %117 = vmatpush1.msra.mxu0 0.0
    %118 = vmatprep.subr.mxu0 0.0
    %119 = vmatpush1.msra.mxu0 0.0
    %120 = vmatprep.subr.mxu0 0.0
    %121 = vmatpush1.msra.mxu0 0.0
    %122 = vmatprep.subr.mxu0 0.0
    %123 = vmatpush1.msra.mxu0 0.0
    %124 = vmatprep.subr.mxu0 0.0
    %125 = vmatpush1.msra.mxu0 0.0
    %126 = vmatprep.subr.mxu0 0.0
    %127 = vmatpush1.msra.mxu0 0.0
    %128 = vmatprep.subr.mxu0 0.0
    %129 = vmatpush1.msra.mxu0 0.0
    %130 = vmatprep.subr.mxu0 0.0
    %131 = vmatpush1.msra.mxu0 0.0
    %132 = vmatprep.subr.mxu0 0.0
    %133 = vmatpush1.msra.mxu0 0.0
    %134 = vmatprep.subr.mxu0 0.0
    %135 = vmatpush1.msra.mxu0 0.0
    %136 = vmatprep.subr.mxu0 0.0
    %137 = vmatpush1.msra.mxu0 0.0
    %138 = vmatprep.mubr.f32.mxu0 0.0
    %139 = vmatmul.mubr.f32.gmra.mrb[0].mxu0 %v72
    %v140 = vpop.f32.mrb[0].mxu0
    %v141 = vadd.f32 %v68, %v140
    %v142 = vpop.f32.mrb[0].mxu0
    %143 = vdwg.mxu0
    %v144 = vmax.f32 %v141, 0.0
    %v145 = vld [vmem:[#allocation7] sm:$0xff]
    %v146 = vld [vmem:[#allocation7 + $0x8] sm:$0xff]
    %v147 = vld [vmem:[#allocation7 + $0x10] sm:$0xff]
    %v148 = vld [vmem:[#allocation7 + $0x18] sm:$0xff]
    %v149 = vld [vmem:[#allocation7 + $0x20] sm:$0xff]
    %v150 = vld [vmem:[#allocation7 + $0x28] sm:$0xff]
    %v151 = vld [vmem:[#allocation7 + $0x30] sm:$0xff]
    %v152 = vld [vmem:[#allocation7 + $0x38] sm:$0xff]
    %v153 = vld [vmem:[#allocation7 + $0x40] sm:$0xff]
    %v154 = vld [vmem:[#allocation7 + $0x48] sm:$0xff]
    %v155 = vld [vmem:[#allocation7 + $0x50] sm:$0xff]
    %v156 = vld [vmem:[#allocation7 + $0x58] sm:$0xff]
    %v157 = vld [vmem:[#allocation7 + $0x60] sm:$0xff]
    %v158 = vld [vmem:[#allocation7 + $0x68] sm:$0xff]
    %v159 = vld [vmem:[#allocation7 + $0x70] sm:$0xff]
    %v160 = vld [vmem:[#allocation7 + $0x78] sm:$0xff]
    %v161 = vld [vmem:[%s4] sm:$0x1]
    %v163 = vlaneseq
    %v164 = vshrl.u32 %v163, 7
    %v165 = vsub.s32 0, %v164
    %v166 = vrot.slane %v161, %v165
    %168 = vmatprep.subr.mxu0 0.0
    %169 = vmatpush1.msra.mxu0 %v145
    %170 = vmatprep.subr.mxu0 0.0
    %171 = vmatpush1.msra.mxu0 %v146
    %172 = vmatprep.subr.mxu0 0.0
    %173 = vmatpush1.msra.mxu0 %v147
    %174 = vmatprep.subr.mxu0 0.0
    %175 = vmatpush1.msra.mxu0 %v148
    %176 = vmatprep.subr.mxu0 0.0
    %177 = vmatpush1.msra.mxu0 %v149
    %178 = vmatprep.subr.mxu0 0.0
    %179 = vmatpush1.msra.mxu0 %v150
    %180 = vmatprep.subr.mxu0 0.0
    %181 = vmatpush1.msra.mxu0 %v151
    %182 = vmatprep.subr.mxu0 0.0
    %183 = vmatpush1.msra.mxu0 %v152
    %184 = vmatprep.subr.mxu0 0.0
    %185 = vmatpush1.msra.mxu0 %v153
    %186 = vmatprep.subr.mxu0 0.0
    %187 = vmatpush1.msra.mxu0 %v154
    %188 = vmatprep.subr.mxu0 0.0
    %189 = vmatpush1.msra.mxu0 %v155
    %190 = vmatprep.subr.mxu0 0.0
    %191 = vmatpush1.msra.mxu0 %v156
    %192 = vmatprep.subr.mxu0 0.0
    %193 = vmatpush1.msra.mxu0 %v157
    %194 = vmatprep.subr.mxu0 0.0
    %195 = vmatpush1.msra.mxu0 %v158
    %196 = vmatprep.subr.mxu0 0.0
    %197 = vmatpush1.msra.mxu0 %v159
    %198 = vmatprep.subr.mxu0 0.0
    %199 = vmatpush1.msra.mxu0 %v160
    %200 = vmatprep.subr.mxu0 0.0
    %201 = vmatpush1.msra.mxu0 0.0
    %202 = vmatprep.subr.mxu0 0.0
    %203 = vmatpush1.msra.mxu0 0.0
    %204 = vmatprep.subr.mxu0 0.0
    %205 = vmatpush1.msra.mxu0 0.0
    %206 = vmatprep.subr.mxu0 0.0
    %207 = vmatpush1.msra.mxu0 0.0
    %208 = vmatprep.subr.mxu0 0.0
    %209 = vmatpush1.msra.mxu0 0.0
    %210 = vmatprep.subr.mxu0 0.0
    %211 = vmatpush1.msra.mxu0 0.0
    %212 = vmatprep.subr.mxu0 0.0
    %213 = vmatpush1.msra.mxu0 0.0
    %214 = vmatprep.subr.mxu0 0.0
    %215 = vmatpush1.msra.mxu0 0.0
    %216 = vmatprep.subr.mxu0 0.0
    %217 = vmatpush1.msra.mxu0 0.0
    %218 = vmatprep.subr.mxu0 0.0
    %219 = vmatpush1.msra.mxu0 0.0
    %220 = vmatprep.subr.mxu0 0.0
    %221 = vmatpush1.msra.mxu0 0.0
    %222 = vmatprep.subr.mxu0 0.0
    %223 = vmatpush1.msra.mxu0 0.0
    %224 = vmatprep.subr.mxu0 0.0
    %225 = vmatpush1.msra.mxu0 0.0
    %226 = vmatprep.subr.mxu0 0.0
    %227 = vmatpush1.msra.mxu0 0.0
    %228 = vmatprep.subr.mxu0 0.0
    %229 = vmatpush1.msra.mxu0 0.0
    %230 = vmatprep.subr.mxu0 0.0
    %231 = vmatpush1.msra.mxu0 0.0
    %232 = vmatprep.mubr.f32.mxu0 0.0
    %233 = vmatmul.mubr.f32.gmra.mrb[0].mxu0 %v144
    %v234 = vpop.f32.mrb[0].mxu0
    %v235 = vadd.f32 %v166, %v234
    %v236 = vpop.f32.mrb[0].mxu0
    %237 = vdwg.mxu0
    %238 = vst [vmem:[#allocation8] sm:$0xff] %v235
    // Predicated region
    $region34: #{tpu_custom_call.1} parent=1 // pred_check
      _
    $region35: #{tpu_custom_call.1} parent=1 // pred_check_branch
      %240 = sbr.rel (0) target = $region37
    $region36: #{tpu_custom_call.1} parent=1 // pred_region
      %s242 = ssub.s32 128, 128
      %243 = vsyncadd [#allocation4], %s242
      %s245 = sshll.u32 [#allocation8], 4
      %s246 = int_to_ptr.vmem [resolvable:$true] %s245
      %248 = dma.vmem_to_hbm [thread:$0]  %s246, 128, %s5, [#allocation4]
    $region37: #{tpu_custom_call.1} parent=1 // pred_fallthru
      _
    // Predicated region
    $region38: #{tpu_custom_call.1} parent=1 // pred_check
      _
    $region39: #{tpu_custom_call.1} parent=1 // pred_check_branch
      %250 = sbr.rel (0) target = $region41
    $region40: #{tpu_custom_call.1} parent=1 // pred_region
      %251 = dma.done [#allocation4], 128
    $region41: #{tpu_custom_call.1} parent=1 // pred_fallthru
      _
    %252 = vsyncpa [#allocation3], 1
    %253 = vsyncpa [#allocation6], 1
    %254 = vsyncpa [#allocation4], 1

</llo_original>
